<compile_context>
chip_gen: v7x
topology: tpu7x:2x2x1
jax: 0.10.0
libtpu: 0.0.40
codegen_flags: <defaults>
</compile_context>

<pallas_src>
import numpy as np
import jax
import jax.numpy as jnp
from jax.experimental import pallas as pl
from jax.experimental.pallas import tpu as pltpu


# ----------------------------- parameters -----------------------------------

def _get_offset_bias(ks):
    """Replicates MaxPoolSoftSelect._get_offset_bias -> shape (4, ks*ks)."""
    r = np.arange(ks, dtype=np.float32) - (ks - 1.0) / 2.0
    off = np.zeros((4, ks, ks), np.float32)
    off[:2, :, :] = r[None, :, None]   # channels 0,1: row offset within the window
    off[2:, :, :] = r[None, None, :]   # channels 2,3: col offset within the window
    return jnp.asarray(off.reshape(4, -1))


# ------------------------------- helpers -------------------------------------

def _cdiv(a, b):
    return (a + b - 1) // b


def _round_up(a, b):
    return _cdiv(a, b) * b


def _patch(x, ki, kj, h, w, stride):
    """One F.unfold window position: strided slice over the last two dims."""
    return x[..., ki:ki + (h - 1) * stride + 1:stride,
                  kj:kj + (w - 1) * stride + 1:stride]


def _pick_lane_config():
    """Generation-gated (lane_block, vmem_limit_bytes)."""
    vmem_cap = 64 * 1024 * 1024
    try:
        vmem_cap = int(pltpu.get_tpu_info().vmem_capacity_bytes)
    except Exception:
        pass
    if vmem_cap <= 64 * 1024 * 1024:
        # v7x class: 64 MiB VMEM per TensorCore -> smaller blocks, <=48 MiB scoped.
        return 16384, 44 * 1024 * 1024
    # v5e / v6e class (128 MiB VMEM).  On v6e, lane_block up to 65536 is a
    # small additional win; 32768 is a safe default for both.
    return 32768, 88 * 1024 * 1024


# ------------------------------ kernel ----------------------------------------

def _pool_select_kernel(alpha_ref, addi_ref, sf_ref, of_ref, out_ref):
    alpha = alpha_ref[0]                                   # scalar (SMEM)
    sf = sf_ref[...]                                       # (kk, L) f32

    # --- max-pool over the ks*ks window positions (sublane/XLU reduction) ---
    out_ref[0:1, :] = jnp.max(sf, axis=0, keepdims=True)   # score_pool row

    # --- softmax over window positions (logits = alpha * score), deferred norm ---
    logits = sf * alpha
    m = jnp.max(logits, axis=0, keepdims=True)             # (1, L)
    e = jnp.exp(logits - m)                                # (kk, L) un-normalized
    inv = pl.reciprocal(jnp.sum(e, axis=0, keepdims=True), approx=True)  # (1, L)

    # --- offset_addi term as a tiny (4,kk)x(kk,L) matmul on the idle MXU ---
    addi_e = jnp.dot(addi_ref[...], e,
                     preferred_element_type=jnp.float32)   # (4, L)

    # --- softmax-weighted sum of the offsets, one component at a time ---
    # (keeps Mosaic temporaries (kk, L)-sized; bf16 offsets upcast on the fly)
    for comp in range(4):
        of_c = of_ref[comp].astype(jnp.float32)            # (kk, L)
        acc = jnp.sum(of_c * e, axis=0, keepdims=True)      # (1, L)
        out_ref[comp + 1:comp + 2, :] = (acc + addi_e[comp:comp + 1, :]) * inv


# ------------------------------ wrapper ---------------------------------------

def max_pool_soft_select(score, offset, offset_addi, alpha, ks, stride,
                         lane_block=None):
    n, c, H, W = score.shape
    assert offset.shape == (n, 4 * c, H, W)
    h = int(np.ceil((H - ks + 1.0) / stride))
    w = int(np.ceil((W - ks + 1.0) / stride))
    kk = ks * ks
    M = n * c * h * w

    auto_block, vmem_limit = _pick_lane_config()
    if lane_block is None:
        lane_block = auto_block

    # Grid: target at least 2 (up to 4) lane blocks when M allows, so the
    # "parallel" grid axis engages both v7x TensorCores and the BlockSpec
    # pipeline has steps to overlap; each block is a multiple of 128 lanes.
    G = max(_cdiv(M, lane_block), min(4, _cdiv(M, 128)))
    L = _round_up(_cdiv(M, G), 128)
    G = _cdiv(M, L)          # drop empty trailing blocks; last block may be ragged

    # --- fold tensors built layout-direct (no standalone transpose / pad) ---
    # score fold: (kk, M) f32, flattened patches stacked on the leading axis.
    sf = jnp.stack(
        [_patch(score, ki, kj, h, w, stride).reshape(M)
         for ki in range(ks) for kj in range(ks)],
        axis=0).astype(jnp.float32)

    # offset fold: (4, kk, M) bf16, component-major then window position.
    offset_b = offset.reshape(n, c, 4, H, W).astype(jnp.bfloat16)
    of = jnp.stack(
        [_patch(offset_b[:, :, comp], ki, kj, h, w, stride).reshape(M)
         for comp in range(4) for ki in range(ks) for kj in range(ks)],
        axis=0).reshape(4, kk, M)

    addi = offset_addi.astype(jnp.float32).reshape(4, kk)   # tiny, resident
    alpha = jnp.asarray(alpha, dtype=jnp.float32).reshape(1)

    out = pl.pallas_call(
        _pool_select_kernel,
        out_shape=jax.ShapeDtypeStruct((5, M), jnp.float32),
        grid=(G,),
        in_specs=[
            pl.BlockSpec(memory_space=pltpu.MemorySpace.SMEM),   # alpha (scalar)
            pl.BlockSpec((4, kk), lambda i: (0, 0)),             # offset_addi
            pl.BlockSpec((kk, L), lambda i: (0, i)),             # score fold
            pl.BlockSpec((4, kk, L), lambda i: (0, 0, i)),       # offset fold (bf16)
        ],
        out_specs=pl.BlockSpec((5, L), lambda i: (0, i)),        # merged output slab
        compiler_params=pltpu.CompilerParams(
            dimension_semantics=("parallel",),
            vmem_limit_bytes=vmem_limit),
    )(alpha, addi, sf, of)

    # Split the merged slab and restore NCHW (output-side transpose is small:
    # ~4*M*4 bytes vs ~108*M bytes of fold traffic).
    score_pool = out[0].reshape(n, c, h, w)
    offset_pool = (out[1:5]
                   .reshape(4, n, c, h, w)
                   .transpose(1, 2, 0, 3, 4)                      # (n, c, 4, h, w)
                   .reshape(n, c * 4, h, w))
    return score_pool, offset_pool


# ------------------------- pure-JAX reference ----------------------------------

def reference(score, offset, offset_addi, alpha, ks, stride):
    n, c, H, W = score.shape
    h = int(np.ceil((H - ks + 1.0) / stride))
    w = int(np.ceil((W - ks + 1.0) / stride))
    kk = ks * ks
    sf = jnp.stack([_patch(score, ki, kj, h, w, stride)
                    for ki in range(ks) for kj in range(ks)], axis=2)   # (n,c,kk,h,w)
    of = jnp.stack([_patch(offset, ki, kj, h, w, stride)
                    for ki in range(ks) for kj in range(ks)], axis=2)   # (n,4c,kk,h,w)
    of = of.reshape(n, c, 4, kk, h, w)
    score_pool = jnp.max(sf, axis=2)                                    # (n,c,h,w)
    prob = jax.nn.softmax(sf[:, :, None] * alpha.reshape(()), axis=3)   # (n,c,1,kk,h,w)
    addi = offset_addi.astype(jnp.float32).reshape(1, 1, 4, kk, 1, 1)
    offset_pool = jnp.sum(prob * (of + addi), axis=3)                   # (n,c,4,h,w)
    return score_pool, offset_pool.reshape(n, c * 4, h, w)


# ---------------------------------- main ---------------------------------------

if __name__ == "__main__":
    key = jax.random.PRNGKey(0)
    k1, k2 = jax.random.split(key)

    n, c, H, W = 2, 4, 16, 16
    ks, stride = 3, 2

    score = jax.random.normal(k1, (n, c, H, W), jnp.float32)
    offset = jax.random.normal(k2, (n, 4 * c, H, W), jnp.float32)

    # deterministic parameters (matches nn.Module __init__)
    offset_addi = _get_offset_bias(ks)            # (4, ks*ks)
    alpha = jnp.ones((1,), jnp.float32)           # torch.ones(1)

    sp, op = max_pool_soft_select(score, offset, offset_addi, alpha, ks, stride)
    jax.block_until_ready((sp, op))

    h = int(np.ceil((H - ks + 1.0) / stride))
    w = int(np.ceil((W - ks + 1.0) / stride))
    assert sp.shape == (n, c, h, w) and op.shape == (n, 4 * c, h, w)

    # Reference: score_pool is exact (f32 path); offset_pool is compared against
    # a reference fed the same bf16-quantized offsets the kernel DMAs, with a
    # looser tolerance covering the approx reciprocal / MXU addi term.
    sp_ref, _ = reference(score, offset, offset_addi, alpha, ks, stride)
    offset_q = offset.astype(jnp.bfloat16).astype(jnp.float32)
    _, op_ref = reference(score, offset_q, offset_addi, alpha, ks, stride)

    np.testing.assert_allclose(np.asarray(sp), np.asarray(sp_ref), rtol=1e-5, atol=1e-5)
    np.testing.assert_allclose(np.asarray(op), np.asarray(op_ref), rtol=1e-2, atol=1e-2)

    print("KERNEL_OK")
</pallas_src>

<mosaic_0001>
module attributes {stable_mosaic.version = 11 : i64} {
  func.func @_pool_select_kernel(%arg0: i32, %arg1: memref<1xf32, #tpu.memory_space<smem>>, %arg2: memref<4x9xf32, #tpu.memory_space<vmem>>, %arg3: memref<9x128xf32, #tpu.memory_space<vmem>>, %arg4: memref<4x9x128xbf16, #tpu.memory_space<vmem>>, %arg5: memref<5x128xf32, #tpu.memory_space<vmem>>) attributes {dimension_semantics = [#tpu.dimension_semantics<parallel>], iteration_bounds = array<i64: 4>, scalar_prefetch = 0 : i64, scratch_operands = 0 : i64, tpu.core_type = #tpu.core_type<tc>, window_params = [{transform_indices = @transform_0, window_bounds = array<i64: 1>}, {pipeline_mode = #tpu.pipeline_mode<synchronous>, transform_indices = @transform_1, window_bounds = array<i64: 4, 9>}, {transform_indices = @transform_2, window_bounds = array<i64: 9, 128>}, {transform_indices = @transform_3, window_bounds = array<i64: 4, 9, 128>}, {transform_indices = @transform_4, window_bounds = array<i64: 5, 128>}]} {
    %c0 = arith.constant 0 : index
    %0 = memref.load %arg1[%c0] : memref<1xf32, #tpu.memory_space<smem>>
    %c0_0 = arith.constant 0 : index
    %c0_1 = arith.constant 0 : index
    %1 = vector.load %arg3[%c0_0, %c0_1] : memref<9x128xf32, #tpu.memory_space<vmem>>, vector<9x128xf32>
    %cst = arith.constant dense<0xFF800000> : vector<128xf32>
    %2 = vector.multi_reduction <maximumf>, %1, %cst [0] : vector<9x128xf32> to vector<128xf32>
    %3 = vector.shape_cast %2 : vector<128xf32> to vector<1x128xf32>
    %c0_2 = arith.constant 0 : index
    %c0_3 = arith.constant 0 : index
    %4 = vector.load %arg5[%c0_2, %c0_3] : memref<5x128xf32, #tpu.memory_space<vmem>>, vector<1x128xf32>
    tpu.vector_store %arg5[%c0_2, %c0_3], %3 {strides = array<i32>} : memref<5x128xf32, #tpu.memory_space<vmem>>, vector<1x128xf32>,
    %5 = vector.broadcast %0 : f32 to vector<9x128xf32>
    %6 = arith.mulf %1, %5 : vector<9x128xf32>
    %cst_4 = arith.constant dense<0xFF800000> : vector<128xf32>
    %7 = vector.multi_reduction <maximumf>, %6, %cst_4 [0] : vector<9x128xf32> to vector<128xf32>
    %8 = vector.shape_cast %7 : vector<128xf32> to vector<1x128xf32>
    %9 = vector.broadcast %8 : vector<1x128xf32> to vector<9x128xf32>
    %10 = arith.subf %6, %9 : vector<9x128xf32>
    %11 = math.exp %10 : vector<9x128xf32>
    %cst_5 = arith.constant dense<0.000000e+00> : vector<128xf32>
    %12 = vector.multi_reduction <add>, %11, %cst_5 [0] : vector<9x128xf32> to vector<128xf32>
    %13 = vector.shape_cast %12 : vector<128xf32> to vector<1x128xf32>
    %14 = tpu.reciprocal %13 {approx = true} : vector<1x128xf32> -> vector<1x128xf32>
    %c0_6 = arith.constant 0 : index
    %c0_7 = arith.constant 0 : index
    %15 = vector.load %arg2[%c0_6, %c0_7] : memref<4x9xf32, #tpu.memory_space<vmem>>, vector<4x9xf32>
    %cst_8 = arith.constant dense<0.000000e+00> : vector<4x128xf32>
    %16 = tpu.matmul %15, %11, %cst_8 {dimension_numbers = #tpu.dot_dimension_numbers<[1], [0], [0], [1], [0, 0, 1, 1], [], []>} : vector<4x9xf32>, vector<9x128xf32>, vector<4x128xf32> -> vector<4x128xf32>
    %c0_9 = arith.constant 0 : index
    %c0_10 = arith.constant 0 : index
    %c0_11 = arith.constant 0 : index
    %17 = vector.load %arg4[%c0_9, %c0_10, %c0_11] : memref<4x9x128xbf16, #tpu.memory_space<vmem>>, vector<1x9x128xbf16>
    %18 = vector.shape_cast %17 : vector<1x9x128xbf16> to vector<9x128xbf16>
    %19 = arith.extf %18 : vector<9x128xbf16> to vector<9x128xf32>
    %20 = arith.mulf %19, %11 : vector<9x128xf32>
    %cst_12 = arith.constant dense<0.000000e+00> : vector<128xf32>
    %21 = vector.multi_reduction <add>, %20, %cst_12 [0] : vector<9x128xf32> to vector<128xf32>
    %22 = vector.shape_cast %21 : vector<128xf32> to vector<1x128xf32>
    %23 = vector.extract_strided_slice %16 {offsets = [0, 0], sizes = [1, 128], strides = [1, 1]} : vector<4x128xf32> to vector<1x128xf32>
    %24 = arith.addf %22, %23 : vector<1x128xf32>
    %25 = arith.mulf %24, %14 : vector<1x128xf32>
    %c1 = arith.constant 1 : index
    %c0_13 = arith.constant 0 : index
    %26 = vector.load %arg5[%c1, %c0_13] : memref<5x128xf32, #tpu.memory_space<vmem>>, vector<1x128xf32>
    tpu.vector_store %arg5[%c1, %c0_13], %25 {strides = array<i32>} : memref<5x128xf32, #tpu.memory_space<vmem>>, vector<1x128xf32>,
    %c1_14 = arith.constant 1 : index
    %c0_15 = arith.constant 0 : index
    %c0_16 = arith.constant 0 : index
    %27 = vector.load %arg4[%c1_14, %c0_15, %c0_16] : memref<4x9x128xbf16, #tpu.memory_space<vmem>>, vector<1x9x128xbf16>
    %28 = vector.shape_cast %27 : vector<1x9x128xbf16> to vector<9x128xbf16>
    %29 = arith.extf %28 : vector<9x128xbf16> to vector<9x128xf32>
    %30 = arith.mulf %29, %11 : vector<9x128xf32>
    %cst_17 = arith.constant dense<0.000000e+00> : vector<128xf32>
    %31 = vector.multi_reduction <add>, %30, %cst_17 [0] : vector<9x128xf32> to vector<128xf32>
    %32 = vector.shape_cast %31 : vector<128xf32> to vector<1x128xf32>
    %33 = vector.extract_strided_slice %16 {offsets = [1, 0], sizes = [1, 128], strides = [1, 1]} : vector<4x128xf32> to vector<1x128xf32>
    %34 = arith.addf %32, %33 : vector<1x128xf32>
    %35 = arith.mulf %34, %14 : vector<1x128xf32>
    %c2 = arith.constant 2 : index
    %c0_18 = arith.constant 0 : index
    %36 = vector.load %arg5[%c2, %c0_18] : memref<5x128xf32, #tpu.memory_space<vmem>>, vector<1x128xf32>
    tpu.vector_store %arg5[%c2, %c0_18], %35 {strides = array<i32>} : memref<5x128xf32, #tpu.memory_space<vmem>>, vector<1x128xf32>,
    %c2_19 = arith.constant 2 : index
    %c0_20 = arith.constant 0 : index
    %c0_21 = arith.constant 0 : index
    %37 = vector.load %arg4[%c2_19, %c0_20, %c0_21] : memref<4x9x128xbf16, #tpu.memory_space<vmem>>, vector<1x9x128xbf16>
    %38 = vector.shape_cast %37 : vector<1x9x128xbf16> to vector<9x128xbf16>
    %39 = arith.extf %38 : vector<9x128xbf16> to vector<9x128xf32>
    %40 = arith.mulf %39, %11 : vector<9x128xf32>
    %cst_22 = arith.constant dense<0.000000e+00> : vector<128xf32>
    %41 = vector.multi_reduction <add>, %40, %cst_22 [0] : vector<9x128xf32> to vector<128xf32>
    %42 = vector.shape_cast %41 : vector<128xf32> to vector<1x128xf32>
    %43 = vector.extract_strided_slice %16 {offsets = [2, 0], sizes = [1, 128], strides = [1, 1]} : vector<4x128xf32> to vector<1x128xf32>
    %44 = arith.addf %42, %43 : vector<1x128xf32>
    %45 = arith.mulf %44, %14 : vector<1x128xf32>
    %c3 = arith.constant 3 : index
    %c0_23 = arith.constant 0 : index
    %46 = vector.load %arg5[%c3, %c0_23] : memref<5x128xf32, #tpu.memory_space<vmem>>, vector<1x128xf32>
    tpu.vector_store %arg5[%c3, %c0_23], %45 {strides = array<i32>} : memref<5x128xf32, #tpu.memory_space<vmem>>, vector<1x128xf32>,
    %c3_24 = arith.constant 3 : index
    %c0_25 = arith.constant 0 : index
    %c0_26 = arith.constant 0 : index
    %47 = vector.load %arg4[%c3_24, %c0_25, %c0_26] : memref<4x9x128xbf16, #tpu.memory_space<vmem>>, vector<1x9x128xbf16>
    %48 = vector.shape_cast %47 : vector<1x9x128xbf16> to vector<9x128xbf16>
    %49 = arith.extf %48 : vector<9x128xbf16> to vector<9x128xf32>
    %50 = arith.mulf %49, %11 : vector<9x128xf32>
    %cst_27 = arith.constant dense<0.000000e+00> : vector<128xf32>
    %51 = vector.multi_reduction <add>, %50, %cst_27 [0] : vector<9x128xf32> to vector<128xf32>
    %52 = vector.shape_cast %51 : vector<128xf32> to vector<1x128xf32>
    %53 = vector.extract_strided_slice %16 {offsets = [3, 0], sizes = [1, 128], strides = [1, 1]} : vector<4x128xf32> to vector<1x128xf32>
    %54 = arith.addf %52, %53 : vector<1x128xf32>
    %55 = arith.mulf %54, %14 : vector<1x128xf32>
    %c4 = arith.constant 4 : index
    %c0_28 = arith.constant 0 : index
    %56 = vector.load %arg5[%c4, %c0_28] : memref<5x128xf32, #tpu.memory_space<vmem>>, vector<1x128xf32>
    tpu.vector_store %arg5[%c4, %c0_28], %55 {strides = array<i32>} : memref<5x128xf32, #tpu.memory_space<vmem>>, vector<1x128xf32>,
    return
  }
  func.func @transform_0(%arg0: i32) -> i32 {
    %c0_i32 = arith.constant 0 : i32
    %c0_i32_0 = arith.constant 0 : i32
    return %c0_i32 : i32
  }
  func.func @transform_1(%arg0: i32) -> (i32, i32) {
    %c0_i32 = arith.constant 0 : i32
    %c0_i32_0 = arith.constant 0 : i32
    %c0_i32_1 = arith.constant 0 : i32
    return %c0_i32, %c0_i32_0 : i32, i32
  }
  func.func @transform_2(%arg0: i32) -> (i32, i32) {
    %c0_i32 = arith.constant 0 : i32
    %c0_i32_0 = arith.constant 0 : i32
    return %c0_i32, %arg0 : i32, i32
  }
  func.func @transform_3(%arg0: i32) -> (i32, i32, i32) {
    %c0_i32 = arith.constant 0 : i32
    %c0_i32_0 = arith.constant 0 : i32
    %c0_i32_1 = arith.constant 0 : i32
    return %c0_i32, %c0_i32_0, %arg0 : i32, i32, i32
  }
  func.func @transform_4(%arg0: i32) -> (i32, i32) {
    %c0_i32 = arith.constant 0 : i32
    %c0_i32_0 = arith.constant 0 : i32
    return %c0_i32, %arg0 : i32, i32
  }
}

</mosaic_0001>

<llo_original>
// kernel: tpu_custom_call.1
$region0: #{tpu_custom_call.1}
  #allocation0 [shape = 'u32[]', space=smem, size = 0x4, offset = 0x4, fixed_abs, tag = 'smem constant byte address 0x4 - core index']
  #allocation1 [shape = 'u32[144,128]{1,0:T(1,128)}', space=vmem, size = 0x12000, scoped, tag = 'internal scratch']
  #allocation2 [shape = 'f32[1]{0:T(128)S(6)}', space=smem, size = 0x200, scoped, tag = 'scoped memory for tpu_custom_call.1']
  %s0 = inlined_call_operand.<no memory space> [shape: f32[1], index: 0, kind: input, shape index: {}]
  %s1 = inlined_call_operand.vmem [shape: f32[4,9], index: 1, kind: input, shape index: {}]
  %s2 = inlined_call_operand.vmem [shape: f32[9,392], index: 2, kind: input, shape index: {}]
  %s3 = inlined_call_operand.vmem [shape: bf16[4,9,392], index: 3, kind: input, shape index: {}]
  %s4 = inlined_call_operand.hbm [shape: f32[5,392], index: 4, kind: output, shape index: {}]
  %s5 = sld [smem:[#allocation0]]
  $region128: #{tpu_custom_call.1} parent=0
    _
  %s7 = ssub.s32 1, %s5
  %s8 = scalar_select 0, %s7, %s5
  %9 = sst [smem:[#allocation2]] %s0
  $region1: #{tpu_custom_call.1} parent=0
    #allocation3 [shape = 'u8[16384]{0}', space=vmem, size = 0x4000, scoped, tag = 'input window, operand 2']
    #allocation4 [shape = 'u8[32768]{0}', space=vmem, size = 0x8000, scoped, tag = 'input window, operand 3']
    #allocation5 [shape = 'u8[8192]{0}', space=vmem, size = 0x2000, scoped, tag = 'output window, operand 0']
    #allocation6 [shape = 's32[2]{0}', space=sflag, size = 0x8, scoped, tag = 'scoped memory for tpu_custom_call.1']
    %10 = vsyncpa [#allocation6], 0
    %s11 = scalar_lea.sflag [#allocation6], 1
    %12 = vsyncpa %s11, 0
    loop: start=0, step=1, limit=6
    $region2: #{tpu_custom_call.1} parent=1 // loop_pre_header
      _
    $region3: #{tpu_custom_call.1} parent=1 // loop_header
      %s14 = sphi 0, %s18
      %p15 = scmp.ge.s32.totalorder %s14, 6
      %s22 = sphi 0, %s22
      %s24 = sphi 0, %s22
      %s25 = sphi 0, %s24
      %s39 = sphi 0, %s25
      %s43 = sphi 0, %s43
      %s45 = sphi 0, %s43
      %s46 = sphi 0, %s45
      %s60 = sphi 0, %s46
      %s66 = sphi 0, %s68
      %s69 = sphi 0, %s66
      %s70 = sphi 0, %s69
      %s86 = sphi 0, %s70
      %s92 = sphi 0, %s94
      %s95 = sphi 0, %s92
      %s96 = sphi 0, %s95
      %s112 = sphi 0, %s96
      %s118 = sphi 0, %s120
      %s121 = sphi 0, %s118
      %s122 = sphi 0, %s121
      %s138 = sphi 0, %s122
    $region4: #{tpu_custom_call.1} parent=1 // loop_header_branch
      %17 = sbr.rel (%p15) target = $region8
    $region5: #{tpu_custom_call.1} parent=1 // loop_body
      %s19 = ssub.s32 %s14, 1
      %s20 = ssub.s32 %s14, 2
      %s21 = sadd.s32 %s14, 1
      %s23 = sadd.s32 %s22, 1
      %p26 = scmp.eq.s32.totalorder %s14, 3
      %p27 = scmp.ne.s32.totalorder %s22, %s24
      %p28 = scmp.eq.s32.totalorder %s14, 0
      %p29 = por %p27, %p28
      %p30 = scmp.ne.s32.totalorder %s22, %s24
      %p31 = scmp.eq.s32.totalorder %s19, 3
      %p32 = por %p30, %p31
      %p33 = scmp.ne.s32.totalorder %s24, %s25
      %p34 = scmp.eq.s32.totalorder %s19, 0
      %p35 = por %p33, %p34
      %p36 = scmp.ne.s32.totalorder %s24, %s25
      %p37 = scmp.eq.s32.totalorder %s20, 3
      %p38 = por %p36, %p37
      %p40 = scmp.ne.s32.totalorder %s25, %s39
      %p41 = scmp.eq.s32.totalorder %s20, 0
      %p42 = por %p40, %p41
      %s44 = sadd.s32 %s43, 1
      %p47 = scmp.eq.s32.totalorder %s14, 3
      %p48 = scmp.ne.s32.totalorder %s43, %s45
      %p49 = scmp.eq.s32.totalorder %s14, 0
      %p50 = por %p48, %p49
      %p51 = scmp.ne.s32.totalorder %s43, %s45
      %p52 = scmp.eq.s32.totalorder %s19, 3
      %p53 = por %p51, %p52
      %p54 = scmp.ne.s32.totalorder %s45, %s46
      %p55 = scmp.eq.s32.totalorder %s19, 0
      %p56 = por %p54, %p55
      %p57 = scmp.ne.s32.totalorder %s45, %s46
      %p58 = scmp.eq.s32.totalorder %s20, 3
      %p59 = por %p57, %p58
      %p61 = scmp.ne.s32.totalorder %s46, %s60
      %p62 = scmp.eq.s32.totalorder %s20, 0
      %p63 = por %p61, %p62
      %s64 = ssub.s32 %s14, %s21
      %p65 = scmp.eq.s32.totalorder %s64, 0
      %s67 = sadd.s32 %s66, 1
      %s68 = scalar_select %p65, %s66, %s67
      %p71 = pneg %p65
      %p72 = scmp.eq.s32.totalorder %s14, 3
      %p73 = por %p71, %p72
      %p74 = scmp.ne.s32.totalorder %s66, %s69
      %p75 = scmp.eq.s32.totalorder %s14, 0
      %p76 = por %p74, %p75
      %p77 = scmp.ne.s32.totalorder %s66, %s69
      %p78 = scmp.eq.s32.totalorder %s19, 3
      %p79 = por %p77, %p78
      %p80 = scmp.ne.s32.totalorder %s69, %s70
      %p81 = scmp.eq.s32.totalorder %s19, 0
      %p82 = por %p80, %p81
      %p83 = scmp.ne.s32.totalorder %s69, %s70
      %p84 = scmp.eq.s32.totalorder %s20, 3
      %p85 = por %p83, %p84
      %p87 = scmp.ne.s32.totalorder %s70, %s86
      %p88 = scmp.eq.s32.totalorder %s20, 0
      %p89 = por %p87, %p88
      %s90 = ssub.s32 %s14, %s21
      %p91 = scmp.eq.s32.totalorder %s90, 0
      %s93 = sadd.s32 %s92, 1
      %s94 = scalar_select %p91, %s92, %s93
      %p97 = pneg %p91
      %p98 = scmp.eq.s32.totalorder %s14, 3
      %p99 = por %p97, %p98
      %p100 = scmp.ne.s32.totalorder %s92, %s95
      %p101 = scmp.eq.s32.totalorder %s14, 0
      %p102 = por %p100, %p101
      %p103 = scmp.ne.s32.totalorder %s92, %s95
      %p104 = scmp.eq.s32.totalorder %s19, 3
      %p105 = por %p103, %p104
      %p106 = scmp.ne.s32.totalorder %s95, %s96
      %p107 = scmp.eq.s32.totalorder %s19, 0
      %p108 = por %p106, %p107
      %p109 = scmp.ne.s32.totalorder %s95, %s96
      %p110 = scmp.eq.s32.totalorder %s20, 3
      %p111 = por %p109, %p110
      %p113 = scmp.ne.s32.totalorder %s96, %s112
      %p114 = scmp.eq.s32.totalorder %s20, 0
      %p115 = por %p113, %p114
      %s116 = ssub.s32 %s14, %s21
      %p117 = scmp.eq.s32.totalorder %s116, 0
      %s119 = sadd.s32 %s118, 1
      %s120 = scalar_select %p117, %s118, %s119
      %p123 = pneg %p117
      %p124 = scmp.eq.s32.totalorder %s14, 3
      %p125 = por %p123, %p124
      %p126 = scmp.ne.s32.totalorder %s118, %s121
      %p127 = scmp.eq.s32.totalorder %s14, 0
      %p128 = por %p126, %p127
      %p129 = scmp.ne.s32.totalorder %s118, %s121
      %p130 = scmp.eq.s32.totalorder %s19, 3
      %p131 = por %p129, %p130
      %p132 = scmp.ne.s32.totalorder %s121, %s122
      %p133 = scmp.eq.s32.totalorder %s19, 0
      %p134 = por %p132, %p133
      %p135 = scmp.ne.s32.totalorder %s121, %s122
      %p136 = scmp.eq.s32.totalorder %s20, 3
      %p137 = por %p135, %p136
      %p139 = scmp.ne.s32.totalorder %s122, %s138
      %p140 = scmp.eq.s32.totalorder %s20, 0
      %p141 = por %p139, %p140
      %p142 = scmp.le.s32.totalorder 1, %s14
      %p143 = scmp.lt.s32.totalorder %s14, 5
      %p144 = pnand %p142, %p143
      %p145 = pneg %p144
      // Predicated region
      $region9: #{tpu_custom_call.1} parent=5 // pred_check
        _
      $region10: #{tpu_custom_call.1} parent=5 // pred_check_branch
        %147 = sbr.rel (%p144) target = $region12
      $region11: #{tpu_custom_call.1} parent=5 // pred_region
        %s148 = ssub.s32 %s14, 1
        // Predicated region
        $region13: #{tpu_custom_call.1} parent=11 // pred_check
          %p149 = pneg %p35
        $region14: #{tpu_custom_call.1} parent=11 // pred_check_branch
          %151 = sbr.rel (%p149) target = $region16
        $region15: #{tpu_custom_call.1} parent=11 // pred_region
          _
        $region16: #{tpu_custom_call.1} parent=11 // pred_fallthru
          _
        // Predicated region
        $region17: #{tpu_custom_call.1} parent=11 // pred_check
          %p152 = pneg %p56
        $region18: #{tpu_custom_call.1} parent=11 // pred_check_branch
          %154 = sbr.rel (%p152) target = $region20
        $region19: #{tpu_custom_call.1} parent=11 // pred_region
          _
        $region20: #{tpu_custom_call.1} parent=11 // pred_fallthru
          _
      $region12: #{tpu_custom_call.1} parent=5 // pred_fallthru
        _
      %p155 = scmp.lt.s32.totalorder %s14, 4
      // Predicated region
      $region21: #{tpu_custom_call.1} parent=5 // pred_check
        %p156 = pneg %p155
      $region22: #{tpu_custom_call.1} parent=5 // pred_check_branch
        %158 = sbr.rel (%p156) target = $region24
      $region23: #{tpu_custom_call.1} parent=5 // pred_region
        // Predicated region
        $region25: #{tpu_custom_call.1} parent=23 // pred_check
          %p159 = pneg %p76
        $region26: #{tpu_custom_call.1} parent=23 // pred_check_branch
          %161 = sbr.rel (%p159) target = $region28
        $region27: #{tpu_custom_call.1} parent=23 // pred_region
          %s162 = sand.u32 %s66, 1
          %s163 = sand.u32 %s66, 1
          %s164 = smul.addr %s163, 16
          %s165 = scalar_lea.vmem [#allocation3], %s164
          %s166 = smul.addr %s14, 8
          %s167 = scalar_lea.vmem %s2, %s166
          // Predicated region
          $region29: #{tpu_custom_call.1} parent=27 // pred_check
            _
          $region30: #{tpu_custom_call.1} parent=27 // pred_check_branch
            %169 = sbr.rel (0) target = $region32
          $region31: #{tpu_custom_call.1} parent=27 // pred_region
            // Predicated region
            $region33: #{tpu_custom_call.1} parent=31 // pred_check
              _
            $region34: #{tpu_custom_call.1} parent=31 // pred_check_branch
              %171 = sbr.rel (0) target = $region36
            $region35: #{tpu_custom_call.1} parent=31 // pred_region
              // Predicated region
              $region48: #{tpu_custom_call.1} parent=35 // pred_check
                _
              $region49: #{tpu_custom_call.1} parent=35 // pred_check_branch
                %188 = sbr.rel (0) target = $region51
              $region50: #{tpu_custom_call.1} parent=35 // pred_region
                loop: start=0, step=1, limit=1
                $region52: #{tpu_custom_call.1} parent=50 // loop_pre_header
                  _
                $region53: #{tpu_custom_call.1} parent=50 // loop_header
                  %s190 = sphi 0, %s194
                  %p191 = scmp.ge.s32.totalorder %s190, 1
                  %s195 = sphi %s167, %s167
                  %s196 = sphi %s165, %s165
                $region54: #{tpu_custom_call.1} parent=50 // loop_header_branch
                  %193 = sbr.rel (%p191) target = $region58
                $region55: #{tpu_custom_call.1} parent=50 // loop_body
                  %v197 = vld [vmem:[%s195] sm:$0xff]
                  %198 = vst [vmem:[%s196] sm:$0xff] %v197
                  %v199 = vld [vmem:[%s195 + $0x20] sm:$0xff]
                  %200 = vst [vmem:[%s196 + $0x8] sm:$0xff] %v199
                $region56: #{tpu_custom_call.1} parent=50 // loop_footer
                  %s194 = sadd.s32 1, %s190
                $region57: #{tpu_custom_call.1} parent=50 // loop_footer_branch
                  %189 = sbr.rel target = $region53
                $region58: #{tpu_custom_call.1} parent=50 // loop_exit
                  _
              $region51: #{tpu_custom_call.1} parent=35 // pred_fallthru
                _
              // Predicated region
              $region59: #{tpu_custom_call.1} parent=35 // pred_check
                _
              $region60: #{tpu_custom_call.1} parent=35 // pred_check_branch
                %202 = sbr.rel target = $region62
              $region61: #{tpu_custom_call.1} parent=35 // pred_region
                _
              $region62: #{tpu_custom_call.1} parent=35 // pred_fallthru
                _
            $region36: #{tpu_custom_call.1} parent=31 // pred_fallthru
              _
            // Predicated region
            $region37: #{tpu_custom_call.1} parent=31 // pred_check
              _
            $region38: #{tpu_custom_call.1} parent=31 // pred_check_branch
              %173 = sbr.rel target = $region40
            $region39: #{tpu_custom_call.1} parent=31 // pred_region
              loop: start=0, step=1, limit=1
              $region41: #{tpu_custom_call.1} parent=39 // loop_pre_header
                _
              $region42: #{tpu_custom_call.1} parent=39 // loop_header
                %s176 = sphi 0, %s180
                %p177 = scmp.ge.s32.totalorder %s176, 1
                %s181 = sphi %s167, %s167
                %s182 = sphi %s165, %s165
              $region43: #{tpu_custom_call.1} parent=39 // loop_header_branch
                %179 = sbr.rel (%p177) target = $region47
              $region44: #{tpu_custom_call.1} parent=39 // loop_body
                %v183 = vld [vmem:[%s181] sm:$0xff]
                %184 = vst [vmem:[%s182] sm:$0xff] %v183
                %v185 = vld [vmem:[%s181 + $0x20] sm:$0xff]
                %186 = vst [vmem:[%s182 + $0x8] sm:$0xff] %v185
              $region45: #{tpu_custom_call.1} parent=39 // loop_footer
                %s180 = sadd.s32 1, %s176
              $region46: #{tpu_custom_call.1} parent=39 // loop_footer_branch
                %175 = sbr.rel target = $region42
              $region47: #{tpu_custom_call.1} parent=39 // loop_exit
                _
            $region40: #{tpu_custom_call.1} parent=31 // pred_fallthru
              _
          $region32: #{tpu_custom_call.1} parent=27 // pred_fallthru
            _
          %203 = vnop
        $region28: #{tpu_custom_call.1} parent=23 // pred_fallthru
          _
        // Predicated region
        $region63: #{tpu_custom_call.1} parent=23 // pred_check
          %p204 = pneg %p102
        $region64: #{tpu_custom_call.1} parent=23 // pred_check_branch
          %206 = sbr.rel (%p204) target = $region66
        $region65: #{tpu_custom_call.1} parent=23 // pred_region
          %s207 = sand.u32 %s92, 1
          %s208 = sand.u32 %s92, 1
          %s209 = smul.addr %s208, 32
          %s210 = scalar_lea.vmem [#allocation4], %s209
          %s211 = smul.addr %s14, 4
          %s212 = scalar_lea.vmem %s3, %s211
          // Predicated region
          $region67: #{tpu_custom_call.1} parent=65 // pred_check
            _
          $region68: #{tpu_custom_call.1} parent=65 // pred_check_branch
            %214 = sbr.rel (0) target = $region70
          $region69: #{tpu_custom_call.1} parent=65 // pred_region
            // Predicated region
            $region71: #{tpu_custom_call.1} parent=69 // pred_check
              _
            $region72: #{tpu_custom_call.1} parent=69 // pred_check_branch
              %216 = sbr.rel target = $region74
            $region73: #{tpu_custom_call.1} parent=69 // pred_region
              // Predicated region
              $region86: #{tpu_custom_call.1} parent=73 // pred_check
                _
              $region87: #{tpu_custom_call.1} parent=73 // pred_check_branch
                %245 = sbr.rel (0) target = $region89
              $region88: #{tpu_custom_call.1} parent=73 // pred_region
                loop: start=0, step=1, limit=1
                $region90: #{tpu_custom_call.1} parent=88 // loop_pre_header
                  _
                $region91: #{tpu_custom_call.1} parent=88 // loop_header
                  %s247 = sphi 0, %s251
                  %p248 = scmp.ge.s32.totalorder %s247, 1
                  %s252 = sphi %s212, %s212
                  %s253 = sphi %s210, %s210
                $region92: #{tpu_custom_call.1} parent=88 // loop_header_branch
                  %250 = sbr.rel (%p248) target = $region96
                $region93: #{tpu_custom_call.1} parent=88 // loop_body
                  _
                $region94: #{tpu_custom_call.1} parent=88 // loop_footer
                  %s251 = sadd.s32 1, %s247
                $region95: #{tpu_custom_call.1} parent=88 // loop_footer_branch
                  %246 = sbr.rel target = $region91
                $region96: #{tpu_custom_call.1} parent=88 // loop_exit
                  _
                loop: start=0, step=1, limit=1
                $region97: #{tpu_custom_call.1} parent=88 // loop_pre_header
                  _
                $region98: #{tpu_custom_call.1} parent=88 // loop_header
                  %s256 = sphi 0, %s260
                  %p257 = scmp.ge.s32.totalorder %s256, 1
                  %s261 = sphi %s212, %s212
                  %s262 = sphi %s210, %s210
                $region99: #{tpu_custom_call.1} parent=88 // loop_header_branch
                  %259 = sbr.rel (%p257) target = $region103
                $region100: #{tpu_custom_call.1} parent=88 // loop_body
                  %v263 = vld [vmem:[%s261] sm:$0xf]
                  %264 = vst [vmem:[%s262] sm:$0xf] %v263
                  %v265 = vld [vmem:[%s261 + $0x10] sm:$0xf]
                  %266 = vst [vmem:[%s262 + $0x4] sm:$0xf] %v265
                  %v267 = vld [vmem:[%s261 + $0x20] sm:$0xf]
                  %268 = vst [vmem:[%s262 + $0x8] sm:$0xf] %v267
                  %v269 = vld [vmem:[%s261 + $0x30] sm:$0xf]
                  %270 = vst [vmem:[%s262 + $0xc] sm:$0xf] %v269
                  %v271 = vld [vmem:[%s261 + $0x40] sm:$0xf]
                  %272 = vst [vmem:[%s262 + $0x10] sm:$0xf] %v271
                  %v273 = vld [vmem:[%s261 + $0x50] sm:$0xf]
                  %274 = vst [vmem:[%s262 + $0x14] sm:$0xf] %v273
                  %v275 = vld [vmem:[%s261 + $0x60] sm:$0xf]
                  %276 = vst [vmem:[%s262 + $0x18] sm:$0xf] %v275
                  %v277 = vld [vmem:[%s261 + $0x70] sm:$0xf]
                  %278 = vst [vmem:[%s262 + $0x1c] sm:$0xf] %v277
                $region101: #{tpu_custom_call.1} parent=88 // loop_footer
                  %s260 = sadd.s32 1, %s256
                $region102: #{tpu_custom_call.1} parent=88 // loop_footer_branch
                  %255 = sbr.rel target = $region98
                $region103: #{tpu_custom_call.1} parent=88 // loop_exit
                  _
              $region89: #{tpu_custom_call.1} parent=73 // pred_fallthru
                _
            $region74: #{tpu_custom_call.1} parent=69 // pred_fallthru
              _
            // Predicated region
            $region75: #{tpu_custom_call.1} parent=69 // pred_check
              _
            $region76: #{tpu_custom_call.1} parent=69 // pred_check_branch
              %218 = sbr.rel (0) target = $region78
            $region77: #{tpu_custom_call.1} parent=69 // pred_region
              loop: start=0, step=1, limit=1
              $region79: #{tpu_custom_call.1} parent=77 // loop_pre_header
                _
              $region80: #{tpu_custom_call.1} parent=77 // loop_header
                %s221 = sphi 0, %s225
                %p222 = scmp.ge.s32.totalorder %s221, 1
                %s226 = sphi %s212, %s212
                %s227 = sphi %s210, %s210
              $region81: #{tpu_custom_call.1} parent=77 // loop_header_branch
                %224 = sbr.rel (%p222) target = $region85
              $region82: #{tpu_custom_call.1} parent=77 // loop_body
                %v228 = vld [vmem:[%s226] sm:$0xf]
                %229 = vst [vmem:[%s227] sm:$0xf] %v228
                %v230 = vld [vmem:[%s226 + $0x10] sm:$0xf]
                %231 = vst [vmem:[%s227 + $0x4] sm:$0xf] %v230
                %v232 = vld [vmem:[%s226 + $0x20] sm:$0xf]
                %233 = vst [vmem:[%s227 + $0x8] sm:$0xf] %v232
                %v234 = vld [vmem:[%s226 + $0x30] sm:$0xf]
                %235 = vst [vmem:[%s227 + $0xc] sm:$0xf] %v234
                %v236 = vld [vmem:[%s226 + $0x40] sm:$0xf]
                %237 = vst [vmem:[%s227 + $0x10] sm:$0xf] %v236
                %v238 = vld [vmem:[%s226 + $0x50] sm:$0xf]
                %239 = vst [vmem:[%s227 + $0x14] sm:$0xf] %v238
                %v240 = vld [vmem:[%s226 + $0x60] sm:$0xf]
                %241 = vst [vmem:[%s227 + $0x18] sm:$0xf] %v240
                %v242 = vld [vmem:[%s226 + $0x70] sm:$0xf]
                %243 = vst [vmem:[%s227 + $0x1c] sm:$0xf] %v242
              $region83: #{tpu_custom_call.1} parent=77 // loop_footer
                %s225 = sadd.s32 1, %s221
              $region84: #{tpu_custom_call.1} parent=77 // loop_footer_branch
                %220 = sbr.rel target = $region80
              $region85: #{tpu_custom_call.1} parent=77 // loop_exit
                _
            $region78: #{tpu_custom_call.1} parent=69 // pred_fallthru
              _
          $region70: #{tpu_custom_call.1} parent=65 // pred_fallthru
            _
          %279 = vnop
        $region66: #{tpu_custom_call.1} parent=23 // pred_fallthru
          _
      $region24: #{tpu_custom_call.1} parent=5 // pred_fallthru
        _
      %p280 = scmp.le.s32.totalorder 1, %s14
      %p281 = scmp.lt.s32.totalorder %s14, 5
      %p282 = pnand %p280, %p281
      %p283 = pneg %p282
      // Predicated region
      $region104: #{tpu_custom_call.1} parent=5 // pred_check
        _
      $region105: #{tpu_custom_call.1} parent=5 // pred_check_branch
        %285 = sbr.rel (%p282) target = $region107
      $region106: #{tpu_custom_call.1} parent=5 // pred_region
        %s286 = ssub.s32 %s14, 1
        %s287 = sand.u32 %s69, 1
        %s288 = sand.u32 %s69, 1
        %s289 = smul.addr %s288, 16
        %s290 = scalar_lea.vmem [#allocation3], %s289
        // Predicated region
        $region108: #{tpu_custom_call.1} parent=106 // pred_check
          %p291 = pneg %p82
        $region109: #{tpu_custom_call.1} parent=106 // pred_check_branch
          %293 = sbr.rel (%p291) target = $region111
        $region110: #{tpu_custom_call.1} parent=106 // pred_region
          _
        $region111: #{tpu_custom_call.1} parent=106 // pred_fallthru
          _
        %s294 = sand.u32 %s95, 1
        %s295 = sand.u32 %s95, 1
        %s296 = smul.addr %s295, 32
        %s297 = scalar_lea.vmem [#allocation4], %s296
        // Predicated region
        $region112: #{tpu_custom_call.1} parent=106 // pred_check
          %p298 = pneg %p108
        $region113: #{tpu_custom_call.1} parent=106 // pred_check_branch
          %300 = sbr.rel (%p298) target = $region115
        $region114: #{tpu_custom_call.1} parent=106 // pred_region
          _
        $region115: #{tpu_custom_call.1} parent=106 // pred_fallthru
          _
        %p301 = pneg %p35
        %p302 = pneg %p32
        %p303 = pneg %p56
        %p304 = pneg %p53
        %s305 = sand.u32 %s69, 1
        %s306 = sand.u32 %s69, 1
        %s307 = smul.addr %s306, 16
        %s308 = scalar_lea.vmem [#allocation3], %s307
        %p309 = pneg %p82
        %p310 = pneg %p79
        %s311 = sand.u32 %s95, 1
        %s312 = sand.u32 %s95, 1
        %s313 = smul.addr %s312, 32
        %s314 = scalar_lea.vmem [#allocation4], %s313
        %p315 = pneg %p108
        %p316 = pneg %p105
        %p317 = pneg %p134
        %p318 = pneg %p131
        %s319 = sand.u32 %s121, 1
        %s320 = scalar_lea.sflag [#allocation6], %s319
        %s321 = sand.u32 %s121, 1
        %s322 = smul.addr %s321, 8
        %s323 = scalar_lea.vmem [#allocation5], %s322
        %s324 = sld [smem:[#allocation2]]
        %v325 = vld [vmem:[%s290] sm:$0xff]
        %v326 = vld [vmem:[%s290 + $0x8] sm:$0x1]
        %vm327 = vcmask 1040384
        %v328 = vsel %vm327, %v326, -inf
        %v329 = vmax.f32 %v325, %v328
        %v330 = vrot.slane %v329, 4
        %v331 = vmax.f32 %v329, %v330
        %v332 = vrot.slane %v331, 2
        %v333 = vmax.f32 %v331, %v332
        %v334 = vrot.slane %v333, 1
        %v335 = vmax.f32 %v333, %v334
        %336 = vst [vmem:[%s323] sm:$0x1] %v335
        %v337 = vstv %s324
        %v338 = vmul.f32 %v325, %v337
        %v339 = vmul.f32 %v326, %v337
        %v340 = vsel %vm327, %v339, -inf
        %v341 = vmax.f32 %v338, %v340
        %v342 = vrot.slane %v341, 4
        %v343 = vmax.f32 %v341, %v342
        %v344 = vrot.slane %v343, 2
        %v345 = vmax.f32 %v343, %v344
        %v346 = vrot.slane %v345, 1
        %v347 = vmax.f32 %v345, %v346
        %v348 = vsub.f32 %v338, %v347
        %v349 = vsub.f32 %v339, %v347
        %v350 = vmul.f32 %v348, 1.442695
        %v351 = vpow.pop %v350
        %v352 = vmul.f32 %v349, 1.442695
        %v353 = vpow.pop %v352
        %v354 = vsel %vm327, %v353, 0.0
        %v355 = vadd.f32 %v351, %v354
        %v356 = vrot.slane %v355, 4
        %v357 = vadd.f32 %v355, %v356
        %v358 = vrot.slane %v357, 2
        %v359 = vadd.f32 %v357, %v358
        %v360 = vrot.slane %v359, 1
        %v361 = vadd.f32 %v359, %v360
        %v362 = vrcp.pop %v361
        %v363 = vld [vmem:[%s1] sm:$0xf]
        %vm364 = vcmask 72704
        %v366 = vsel %vm364, %v363, 0
        %v369 = vsel %vm327, %v353, 0
        %371 = vmatprep.subr.mxu0 0.0
        %372 = vmatpush1.msra.mxu0 %v351
        %373 = vmatprep.subr.mxu0 0.0
        %374 = vmatpush1.msra.mxu0 %v369
        %375 = vmatprep.subr.mxu0 0.0
        %376 = vmatpush1.msra.mxu0 0.0
        %377 = vmatprep.subr.mxu0 0.0
        %378 = vmatpush1.msra.mxu0 0.0
        %379 = vmatprep.subr.mxu0 0.0
        %380 = vmatpush1.msra.mxu0 0.0
        %381 = vmatprep.subr.mxu0 0.0
        %382 = vmatpush1.msra.mxu0 0.0
        %383 = vmatprep.subr.mxu0 0.0
        %384 = vmatpush1.msra.mxu0 0.0
        %385 = vmatprep.subr.mxu0 0.0
        %386 = vmatpush1.msra.mxu0 0.0
        %387 = vmatprep.subr.mxu0 0.0
        %388 = vmatpush1.msra.mxu0 0.0
        %389 = vmatprep.subr.mxu0 0.0
        %390 = vmatpush1.msra.mxu0 0.0
        %391 = vmatprep.subr.mxu0 0.0
        %392 = vmatpush1.msra.mxu0 0.0
        %393 = vmatprep.subr.mxu0 0.0
        %394 = vmatpush1.msra.mxu0 0.0
        %395 = vmatprep.subr.mxu0 0.0
        %396 = vmatpush1.msra.mxu0 0.0
        %397 = vmatprep.subr.mxu0 0.0
        %398 = vmatpush1.msra.mxu0 0.0
        %399 = vmatprep.subr.mxu0 0.0
        %400 = vmatpush1.msra.mxu0 0.0
        %401 = vmatprep.subr.mxu0 0.0
        %402 = vmatpush1.msra.mxu0 0.0
        %403 = vmatprep.subr.mxu0 0.0
        %404 = vmatpush1.msra.mxu0 0.0
        %405 = vmatprep.subr.mxu0 0.0
        %406 = vmatpush1.msra.mxu0 0.0
        %407 = vmatprep.subr.mxu0 0.0
        %408 = vmatpush1.msra.mxu0 0.0
        %409 = vmatprep.subr.mxu0 0.0
        %410 = vmatpush1.msra.mxu0 0.0
        %411 = vmatprep.subr.mxu0 0.0
        %412 = vmatpush1.msra.mxu0 0.0
        %413 = vmatprep.subr.mxu0 0.0
        %414 = vmatpush1.msra.mxu0 0.0
        %415 = vmatprep.subr.mxu0 0.0
        %416 = vmatpush1.msra.mxu0 0.0
        %417 = vmatprep.subr.mxu0 0.0
        %418 = vmatpush1.msra.mxu0 0.0
        %419 = vmatprep.subr.mxu0 0.0
        %420 = vmatpush1.msra.mxu0 0.0
        %421 = vmatprep.subr.mxu0 0.0
        %422 = vmatpush1.msra.mxu0 0.0
        %423 = vmatprep.subr.mxu0 0.0
        %424 = vmatpush1.msra.mxu0 0.0
        %425 = vmatprep.subr.mxu0 0.0
        %426 = vmatpush1.msra.mxu0 0.0
        %427 = vmatprep.subr.mxu0 0.0
        %428 = vmatpush1.msra.mxu0 0.0
        %429 = vmatprep.subr.mxu0 0.0
        %430 = vmatpush1.msra.mxu0 0.0
        %431 = vmatprep.subr.mxu0 0.0
        %432 = vmatpush1.msra.mxu0 0.0
        %433 = vmatprep.subr.mxu0 0.0
        %434 = vmatpush1.msra.mxu0 0.0
        %435 = vmatprep.mubr.f32.mxu0 0.0
        %436 = vmatmul.mubr.f32.gmra.mrb[0].mxu0 %v366
        %v437 = vpop.f32.mrb[0].mxu0
        %v438 = vadd.f32 0.0, %v437
        %v439 = vpop.f32.mrb[0].mxu0
        %440 = vdwg.mxu0
        %v441 = vld [vmem:[%s297] sm:$0xf]
        %v442 = vld [vmem:[%s297 + $0x4] sm:$0x1]
        %v443 = vunpack.c.l.bf16 %v441
        %v444 = vunpack.c.l.bf16 %v442
        %v445 = vmul.f32 %v443, %v351
        %v446 = vmul.f32 %v444, %v353
        %v447 = vsel %vm327, %v446, 0.0
        %v448 = vadd.f32 %v445, %v447
        %v449 = vrot.slane %v448, 4
        %v450 = vadd.f32 %v448, %v449
        %v451 = vrot.slane %v450, 2
        %v452 = vadd.f32 %v450, %v451
        %v453 = vrot.slane %v452, 1
        %v454 = vadd.f32 %v452, %v453
        %v455 = vadd.f32 %v454, %v438
        %v456 = vmul.f32 %v455, %v362
        %457 = vst [vmem:[%s323 + $0x1] sm:$0x1] %v456
        %s458 = scalar_lea.vmem %s297, 8 [#allocation4]
        %v459 = vld [vmem:[%s458] sm:$0xf]
        %v460 = vld [vmem:[%s458 + $0x4] sm:$0x1]
        %v461 = vunpack.c.l.bf16 %v459
        %v462 = vunpack.c.l.bf16 %v460
        %v463 = vmul.f32 %v461, %v351
        %v464 = vmul.f32 %v462, %v353
        %v465 = vsel %vm327, %v464, 0.0
        %v466 = vadd.f32 %v463, %v465
        %v467 = vrot.slane %v466, 4
        %v468 = vadd.f32 %v466, %v467
        %v469 = vrot.slane %v468, 2
        %v470 = vadd.f32 %v468, %v469
        %v471 = vrot.slane %v470, 1
        %v472 = vadd.f32 %v470, %v471
        %v473 = vadd.f32 %v472, %v438
        %v474 = vmul.f32 %v473, %v362
        %475 = vst [vmem:[%s323 + $0x1] sm:$0x2] %v474
        %s476 = scalar_lea.vmem %s297, 16 [#allocation4]
        %v477 = vld [vmem:[%s476] sm:$0xf]
        %v478 = vld [vmem:[%s476 + $0x4] sm:$0x1]
        %v479 = vunpack.c.l.bf16 %v477
        %v480 = vunpack.c.l.bf16 %v478
        %v481 = vmul.f32 %v479, %v351
        %v482 = vmul.f32 %v480, %v353
        %v483 = vsel %vm327, %v482, 0.0
        %v484 = vadd.f32 %v481, %v483
        %v485 = vrot.slane %v484, 4
        %v486 = vadd.f32 %v484, %v485
        %v487 = vrot.slane %v486, 2
        %v488 = vadd.f32 %v486, %v487
        %v489 = vrot.slane %v488, 1
        %v490 = vadd.f32 %v488, %v489
        %v491 = vadd.f32 %v490, %v438
        %v492 = vmul.f32 %v491, %v362
        %493 = vst [vmem:[%s323 + $0x1] sm:$0x4] %v492
        %s494 = scalar_lea.vmem %s297, 24 [#allocation4]
        %v495 = vld [vmem:[%s494] sm:$0xf]
        %v496 = vld [vmem:[%s494 + $0x4] sm:$0x1]
        %v497 = vunpack.c.l.bf16 %v495
        %v498 = vunpack.c.l.bf16 %v496
        %v499 = vmul.f32 %v497, %v351
        %v500 = vmul.f32 %v498, %v353
        %v501 = vsel %vm327, %v500, 0.0
        %v502 = vadd.f32 %v499, %v501
        %v503 = vrot.slane %v502, 4
        %v504 = vadd.f32 %v502, %v503
        %v505 = vrot.slane %v504, 2
        %v506 = vadd.f32 %v504, %v505
        %v507 = vrot.slane %v506, 1
        %v508 = vadd.f32 %v506, %v507
        %v509 = vadd.f32 %v508, %v438
        %v510 = vmul.f32 %v509, %v362
        %511 = vst [vmem:[%s323 + $0x1] sm:$0x8] %v510
        %s512 = sand.u32 %s121, 1
        %s513 = scalar_lea.sflag [#allocation6], %s512
        %s514 = sand.u32 %s121, 1
        %s515 = smul.addr %s514, 8
        %s516 = scalar_lea.vmem [#allocation5], %s515
        // Predicated region
        $region116: #{tpu_custom_call.1} parent=106 // pred_check
          %p517 = pneg %p131
        $region117: #{tpu_custom_call.1} parent=106 // pred_check_branch
          %519 = sbr.rel (%p517) target = $region119
        $region118: #{tpu_custom_call.1} parent=106 // pred_region
          %s521 = ssub.s32 128, 128
          %522 = vsyncadd %s513, %s521
          %s523 = smul.addr %s19, 128
          %s524 = scalar_lea.hbm %s4, %s523
          %s526 = sshll.u32 %s516, 4
          %s527 = int_to_ptr.vmem [resolvable:$true] %s526
          %529 = dma.vmem_to_hbm [thread:$0]  %s527, 128, %s524, %s513
        $region119: #{tpu_custom_call.1} parent=106 // pred_fallthru
          _
      $region107: #{tpu_custom_call.1} parent=5 // pred_fallthru
        _
      %p530 = scmp.le.s32.totalorder 2, %s14
      // Predicated region
      $region120: #{tpu_custom_call.1} parent=5 // pred_check
        %p531 = pneg %p530
      $region121: #{tpu_custom_call.1} parent=5 // pred_check_branch
        %533 = sbr.rel (%p531) target = $region123
      $region122: #{tpu_custom_call.1} parent=5 // pred_region
        %s534 = ssub.s32 %s14, 2
        // Predicated region
        $region124: #{tpu_custom_call.1} parent=122 // pred_check
          %p535 = pneg %p137
        $region125: #{tpu_custom_call.1} parent=122 // pred_check_branch
          %537 = sbr.rel (%p535) target = $region127
        $region126: #{tpu_custom_call.1} parent=122 // pred_region
          %s538 = sand.u32 %s122, 1
          %s539 = scalar_lea.sflag [#allocation6], %s538
          %s540 = sand.u32 %s122, 1
          %s541 = smul.addr %s540, 8
          %s542 = scalar_lea.vmem [#allocation5], %s541
          %543 = dma.done %s539, 128
        $region127: #{tpu_custom_call.1} parent=122 // pred_fallthru
          _
      $region123: #{tpu_custom_call.1} parent=5 // pred_fallthru
        _
    $region6: #{tpu_custom_call.1} parent=1 // loop_footer
      %s18 = sadd.s32 1, %s14
    $region7: #{tpu_custom_call.1} parent=1 // loop_footer_branch
      %13 = sbr.rel target = $region3
    $region8: #{tpu_custom_call.1} parent=1 // loop_exit
      _
    %544 = vsyncpa [#allocation6], 1
    %s545 = scalar_lea.sflag [#allocation6], 1
    %546 = vsyncpa %s545, 1

</llo_original>
